<compile_context>
chip_gen: v7x
topology: tpu7x:2x2x1
jax: 0.10.0
libtpu: 0.0.40
codegen_flags: <defaults>
</compile_context>

<pallas_src>
import jax
import jax.numpy as jnp
from jax.experimental import pallas as pl
from jax.experimental.pallas import tpu as pltpu

IN_FEATURES = 512
OUT_FEATURES = 1
LANES = 128
MAX_TILE_B = 4096        # 8 MiB f32 x-tile; ~16 MiB double-buffered
MIN_SPLIT_B = 256        # below this, a second grid tile isn't worth the overhead
VMEM_LIMIT_BYTES = 40 * 1024 * 1024


def _round_up(n, m):
    return ((n + m - 1) // m) * m


def _single_output_kernel(x_ref, w_ref, b_ref, o_ref):
    # x_ref: (TB, 512) VMEM (streamed)     w_ref: (1, 512) VMEM (resident, lane-dense)
    # b_ref: (1,)      SMEM (scalar bias)  o_ref: (1, TB)  VMEM (lane-dense row)
    #
    # Fold the 512 input lanes down to 128 with vreg-aligned slices on the VPU
    # (no relayout, no materialized (TB, 512) temporary).
    acc = x_ref[:, 0:LANES] * w_ref[:, 0:LANES]
    for c in range(1, IN_FEATURES // LANES):
        lo = c * LANES
        acc = acc + x_ref[:, lo:lo + LANES] * w_ref[:, lo:lo + LANES]
    # Relayout rows -> lanes (single XLU transpose of the (TB, 128) partials),
    # then reduce the 128 partial products per row across sublanes.  Result is a
    # lane-dense (1, TB) row, so the epilogue + store run at full lane width.
    y = jnp.sum(acc.T, axis=0, keepdims=True) + b_ref[0]
    # Exact sigmoid: exp + divide ride the EUP slot; no approx reciprocal.
    o_ref[...] = (1.0 / (1.0 + jnp.exp(-y))).astype(o_ref.dtype)


def single_output_layer(x, w, b):
    """x: (B, 512) f32, w: (1, 512) f32 (PyTorch layout), b: (1,) f32 -> (B, 1) f32."""
    B = x.shape[0]
    tb = min(MAX_TILE_B, _round_up(max(B, 1), 8))
    if B >= MIN_SPLIT_B:
        # Guarantee >= 2 grid tiles so v7x megacore can shard the batch axis.
        tb = min(tb, _round_up(pl.cdiv(B, 2), 8))
    num_tiles = pl.cdiv(B, tb)

    cost = pl.CostEstimate(
        flops=2 * B * IN_FEATURES,
        bytes_accessed=B * IN_FEATURES * 4 + IN_FEATURES * 4 + 4 + B * 4,
        transcendentals=2 * B,  # exp + reciprocal per row
    )

    out = pl.pallas_call(
        _single_output_kernel,
        # Lane-dense padded slab: (num_tiles, tb); wrapper slices back to (B, 1).
        out_shape=jax.ShapeDtypeStruct((num_tiles, tb), x.dtype),
        grid_spec=pltpu.PrefetchScalarGridSpec(
            num_scalar_prefetch=0,
            grid=(num_tiles,),
            in_specs=[
                pl.BlockSpec((tb, IN_FEATURES), lambda i: (i, 0)),   # streamed x
                pl.BlockSpec((1, IN_FEATURES), lambda i: (0, 0)),    # resident w row
                pl.BlockSpec(memory_space=pltpu.MemorySpace.SMEM),   # scalar bias
            ],
            out_specs=pl.BlockSpec((1, tb), lambda i: (i, 0)),       # lane-dense out
        ),
        compiler_params=pltpu.CompilerParams(
            dimension_semantics=("parallel",),      # megacore sharding on v7x
            vmem_limit_bytes=VMEM_LIMIT_BYTES,      # safe for 4096-row tiles on all gens
        ),
        cost_estimate=cost,
    )(x, w, b)

    return out.reshape(-1)[:B].reshape(B, OUT_FEATURES)


if __name__ == "__main__":
    key = jax.random.PRNGKey(0)
    k_x, k_w, k_b, k_x2 = jax.random.split(key, 4)

    # Parameters in PyTorch nn.Linear layout: weight (1, 512), bias (1,)
    bound = 1.0 / jnp.sqrt(jnp.float32(IN_FEATURES))
    w = jax.random.uniform(k_w, (OUT_FEATURES, IN_FEATURES),
                           minval=-bound, maxval=bound, dtype=jnp.float32)
    b = jax.random.uniform(k_b, (OUT_FEATURES,),
                           minval=-bound, maxval=bound, dtype=jnp.float32)

    # Small batch (latency regime, single tile)
    B = 8
    x = jax.random.normal(k_x, (B, IN_FEATURES), dtype=jnp.float32)
    out = jax.block_until_ready(single_output_layer(x, w, b))
    ref = jax.nn.sigmoid(x @ w.T + b)
    assert out.shape == (B, OUT_FEATURES)
    assert jnp.allclose(out, ref, atol=1e-4, rtol=1e-4)

    # Ragged batch: exercises the >=2-tile megacore split and the padded
    # boundary block of the streamed x / lane-dense output slab.
    B2 = 300
    x2 = jax.random.normal(k_x2, (B2, IN_FEATURES), dtype=jnp.float32)
    out2 = jax.block_until_ready(single_output_layer(x2, w, b))
    ref2 = jax.nn.sigmoid(x2 @ w.T + b)
    assert out2.shape == (B2, OUT_FEATURES)
    assert jnp.allclose(out2, ref2, atol=1e-4, rtol=1e-4)

    print("KERNEL_OK")
</pallas_src>

<mosaic_0001>
module attributes {stable_mosaic.version = 11 : i64} {
  func.func @_single_output_kernel(%arg0: i32, %arg1: memref<8x512xf32, #tpu.memory_space<vmem>>, %arg2: memref<1x512xf32, #tpu.memory_space<vmem>>, %arg3: memref<1xf32, #tpu.memory_space<smem>>, %arg4: memref<1x8xf32, #tpu.memory_space<vmem>>) attributes {dimension_semantics = [#tpu.dimension_semantics<parallel>], iteration_bounds = array<i64: 1>, scalar_prefetch = 0 : i64, scratch_operands = 0 : i64, tpu.core_type = #tpu.core_type<tc>, window_params = [{transform_indices = @transform_0, window_bounds = array<i64: 8, 512>}, {pipeline_mode = #tpu.pipeline_mode<synchronous>, transform_indices = @transform_1, window_bounds = array<i64: 1, 512>}, {transform_indices = @transform_2, window_bounds = array<i64: 1>}, {transform_indices = @transform_3, window_bounds = array<i64: 1, 8>}]} {
    %c0 = arith.constant 0 : index
    %c0_0 = arith.constant 0 : index
    %0 = vector.load %arg1[%c0, %c0_0] : memref<8x512xf32, #tpu.memory_space<vmem>>, vector<8x128xf32>
    %c0_1 = arith.constant 0 : index
    %c0_2 = arith.constant 0 : index
    %1 = vector.load %arg2[%c0_1, %c0_2] : memref<1x512xf32, #tpu.memory_space<vmem>>, vector<1x128xf32>
    %2 = vector.broadcast %1 : vector<1x128xf32> to vector<8x128xf32>
    %3 = arith.mulf %0, %2 : vector<8x128xf32>
    %c0_3 = arith.constant 0 : index
    %c128 = arith.constant 128 : index
    %4 = vector.load %arg1[%c0_3, %c128] : memref<8x512xf32, #tpu.memory_space<vmem>>, vector<8x128xf32>
    %c0_4 = arith.constant 0 : index
    %c128_5 = arith.constant 128 : index
    %5 = vector.load %arg2[%c0_4, %c128_5] : memref<1x512xf32, #tpu.memory_space<vmem>>, vector<1x128xf32>
    %6 = vector.broadcast %5 : vector<1x128xf32> to vector<8x128xf32>
    %7 = arith.mulf %4, %6 : vector<8x128xf32>
    %8 = arith.addf %3, %7 : vector<8x128xf32>
    %c0_6 = arith.constant 0 : index
    %c256 = arith.constant 256 : index
    %9 = vector.load %arg1[%c0_6, %c256] : memref<8x512xf32, #tpu.memory_space<vmem>>, vector<8x128xf32>
    %c0_7 = arith.constant 0 : index
    %c256_8 = arith.constant 256 : index
    %10 = vector.load %arg2[%c0_7, %c256_8] : memref<1x512xf32, #tpu.memory_space<vmem>>, vector<1x128xf32>
    %11 = vector.broadcast %10 : vector<1x128xf32> to vector<8x128xf32>
    %12 = arith.mulf %9, %11 : vector<8x128xf32>
    %13 = arith.addf %8, %12 : vector<8x128xf32>
    %c0_9 = arith.constant 0 : index
    %c384 = arith.constant 384 : index
    %14 = vector.load %arg1[%c0_9, %c384] : memref<8x512xf32, #tpu.memory_space<vmem>>, vector<8x128xf32>
    %c0_10 = arith.constant 0 : index
    %c384_11 = arith.constant 384 : index
    %15 = vector.load %arg2[%c0_10, %c384_11] : memref<1x512xf32, #tpu.memory_space<vmem>>, vector<1x128xf32>
    %16 = vector.broadcast %15 : vector<1x128xf32> to vector<8x128xf32>
    %17 = arith.mulf %14, %16 : vector<8x128xf32>
    %18 = arith.addf %13, %17 : vector<8x128xf32>
    %19 = tpu.transpose %18, [1, 0] : vector<8x128xf32> -> vector<128x8xf32>
    %cst = arith.constant dense<0.000000e+00> : vector<8xf32>
    %20 = vector.multi_reduction <add>, %19, %cst [0] : vector<128x8xf32> to vector<8xf32>
    %21 = vector.shape_cast %20 : vector<8xf32> to vector<1x8xf32>
    %c0_12 = arith.constant 0 : index
    %22 = memref.load %arg3[%c0_12] : memref<1xf32, #tpu.memory_space<smem>>
    %23 = vector.broadcast %22 : f32 to vector<1x8xf32>
    %24 = arith.addf %21, %23 : vector<1x8xf32>
    %cst_13 = arith.constant 0.000000e+00 : f32
    %25 = vector.broadcast %cst_13 : f32 to vector<1x8xf32>
    %26 = arith.subf %25, %24 : vector<1x8xf32>
    %27 = math.exp %26 : vector<1x8xf32>
    %cst_14 = arith.constant 1.000000e+00 : f32
    %28 = vector.broadcast %cst_14 : f32 to vector<1x8xf32>
    %29 = arith.addf %28, %27 : vector<1x8xf32>
    %cst_15 = arith.constant 1.000000e+00 : f32
    %30 = vector.broadcast %cst_15 : f32 to vector<1x8xf32>
    %31 = arith.divf %30, %29 : vector<1x8xf32>
    %c0_16 = arith.constant 0 : index
    %c0_17 = arith.constant 0 : index
    %32 = vector.load %arg4[%c0_16, %c0_17] : memref<1x8xf32, #tpu.memory_space<vmem>>, vector<1x8xf32>
    tpu.vector_store %arg4[%c0_16, %c0_17], %31 {strides = array<i32>} : memref<1x8xf32, #tpu.memory_space<vmem>>, vector<1x8xf32>,
    return
  }
  func.func @transform_0(%arg0: i32) -> (i32, i32) {
    %c0_i32 = arith.constant 0 : i32
    %c0_i32_0 = arith.constant 0 : i32
    return %arg0, %c0_i32 : i32, i32
  }
  func.func @transform_1(%arg0: i32) -> (i32, i32) {
    %c0_i32 = arith.constant 0 : i32
    %c0_i32_0 = arith.constant 0 : i32
    %c0_i32_1 = arith.constant 0 : i32
    return %c0_i32, %c0_i32_0 : i32, i32
  }
  func.func @transform_2(%arg0: i32) -> i32 {
    %c0_i32 = arith.constant 0 : i32
    %c0_i32_0 = arith.constant 0 : i32
    return %c0_i32 : i32
  }
  func.func @transform_3(%arg0: i32) -> (i32, i32) {
    %c0_i32 = arith.constant 0 : i32
    %c0_i32_0 = arith.constant 0 : i32
    return %arg0, %c0_i32 : i32, i32
  }
}

</mosaic_0001>

<llo_original>
// kernel: tpu_custom_call.1
$region0: #{tpu_custom_call.1}
  #allocation0 [shape = 'u32[]', space=smem, size = 0x4, offset = 0x4, fixed_abs, tag = 'smem constant byte address 0x4 - core index']
  #allocation1 [shape = 'u32[144,128]{1,0:T(1,128)}', space=vmem, size = 0x12000, scoped, tag = 'internal scratch']
  #allocation2 [shape = 'f32[1]{0:T(128)S(6)}', space=smem, size = 0x200, scoped, tag = 'scoped memory for tpu_custom_call.1']
  %s0 = inlined_call_operand.hbm [shape: f32[8,512], index: 0, kind: input, shape index: {}]
  %s1 = inlined_call_operand.vmem [shape: f32[1,512], index: 1, kind: input, shape index: {}]
  %s2 = inlined_call_operand.<no memory space> [shape: f32[1], index: 2, kind: input, shape index: {}]
  %s3 = inlined_call_operand.hbm [shape: f32[1,8], index: 3, kind: output, shape index: {}]
  %s4 = sld [smem:[#allocation0]]
  $region26: #{tpu_custom_call.1} parent=0
    _
  %s6 = ssub.s32 1, %s4
  %s7 = scalar_select 0, %s6, %s4
  %8 = sst [smem:[#allocation2]] %s2
  $region1: #{tpu_custom_call.1} parent=0
    #allocation3 [shape = 'u8[16384]{0}', space=vmem, size = 0x4000, scoped, tag = 'input window, operand 0, single buffered']
    #allocation4 [shape = 's32[1]{0}', space=sflag, size = 0x4, scoped, tag = 'scoped memory for tpu_custom_call.1']
    #allocation5 [shape = 's32[1]{0}', space=sflag, size = 0x4, scoped, tag = 'scoped memory for tpu_custom_call.1']
    #allocation6 [shape = 'u8[512]{0}', space=vmem, size = 0x400, scoped, tag = 'output window, operand 0, single buffered']
    %9 = vsyncpa [#allocation4], 0
    %10 = vsyncpa [#allocation5], 0
    // Predicated region
    $region2: #{tpu_custom_call.1} parent=1 // pred_check
      _
    $region3: #{tpu_custom_call.1} parent=1 // pred_check_branch
      %12 = sbr.rel (0) target = $region5
    $region4: #{tpu_custom_call.1} parent=1 // pred_region
      %s14 = ssub.s32 512, 512
      %15 = vsyncadd [#allocation4], %s14
      %s17 = sshll.u32 [#allocation3], 4
      %s18 = int_to_ptr.vmem [resolvable:$true] %s17
      %20 = dma.hbm_to_vmem [thread:$0]  %s0, 512, %s18, [#allocation4]
    $region5: #{tpu_custom_call.1} parent=1 // pred_fallthru
      _
    // Predicated region
    $region6: #{tpu_custom_call.1} parent=1 // pred_check
      _
    $region7: #{tpu_custom_call.1} parent=1 // pred_check_branch
      %22 = sbr.rel (0) target = $region9
    $region8: #{tpu_custom_call.1} parent=1 // pred_region
      _
    $region9: #{tpu_custom_call.1} parent=1 // pred_fallthru
      _
    // Predicated region
    $region10: #{tpu_custom_call.1} parent=1 // pred_check
      _
    $region11: #{tpu_custom_call.1} parent=1 // pred_check_branch
      %24 = sbr.rel (0) target = $region13
    $region12: #{tpu_custom_call.1} parent=1 // pred_region
      _
    $region13: #{tpu_custom_call.1} parent=1 // pred_fallthru
      _
    // Predicated region
    $region14: #{tpu_custom_call.1} parent=1 // pred_check
      _
    $region15: #{tpu_custom_call.1} parent=1 // pred_check_branch
      %26 = sbr.rel (0) target = $region17
    $region16: #{tpu_custom_call.1} parent=1 // pred_region
      %27 = dma.done [#allocation4], 512
    $region17: #{tpu_custom_call.1} parent=1 // pred_fallthru
      _
    %v28 = vld [vmem:[#allocation3] sm:$0xff]
    %v29 = vld [vmem:[%s1] sm:$0x1]
    %v31 = vlaneseq
    %v32 = vshrl.u32 %v31, 7
    %v33 = vsub.s32 0, %v32
    %v34 = vrot.slane %v29, %v33
    %v36 = vmul.f32 %v28, %v34
    %v37 = vld [vmem:[#allocation3 + $0x8] sm:$0xff]
    %v38 = vld [vmem:[%s1 + $0x1] sm:$0x1]
    %v40 = vlaneseq
    %v41 = vshrl.u32 %v40, 7
    %v42 = vsub.s32 0, %v41
    %v43 = vrot.slane %v38, %v42
    %v45 = vmul.f32 %v37, %v43
    %v46 = vadd.f32 %v36, %v45
    %v47 = vld [vmem:[#allocation3 + $0x10] sm:$0xff]
    %v48 = vld [vmem:[%s1 + $0x2] sm:$0x1]
    %v50 = vlaneseq
    %v51 = vshrl.u32 %v50, 7
    %v52 = vsub.s32 0, %v51
    %v53 = vrot.slane %v48, %v52
    %v55 = vmul.f32 %v47, %v53
    %v56 = vadd.f32 %v46, %v55
    %v57 = vld [vmem:[#allocation3 + $0x18] sm:$0xff]
    %v58 = vld [vmem:[%s1 + $0x3] sm:$0x1]
    %v60 = vlaneseq
    %v61 = vshrl.u32 %v60, 7
    %v62 = vsub.s32 0, %v61
    %v63 = vrot.slane %v58, %v62
    %v65 = vmul.f32 %v57, %v63
    %v66 = vadd.f32 %v56, %v65
    %67 = vxpose.xlu0.b32.start [1/16] %v66, 128
    %68 = vxpose.xlu0.b32.cont [2/16] 0.0, 128
    %69 = vxpose.xlu0.b32.cont [3/16] 0.0, 128
    %70 = vxpose.xlu0.b32.cont [4/16] 0.0, 128
    %71 = vxpose.xlu0.b32.cont [5/16] 0.0, 128
    %72 = vxpose.xlu0.b32.cont [6/16] 0.0, 128
    %73 = vxpose.xlu0.b32.cont [7/16] 0.0, 128
    %74 = vxpose.xlu0.b32.cont [8/16] 0.0, 128
    %75 = vxpose.xlu0.b32.cont [9/16] 0.0, 128
    %76 = vxpose.xlu0.b32.cont [10/16] 0.0, 128
    %77 = vxpose.xlu0.b32.cont [11/16] 0.0, 128
    %78 = vxpose.xlu0.b32.cont [12/16] 0.0, 128
    %79 = vxpose.xlu0.b32.cont [13/16] 0.0, 128
    %80 = vxpose.xlu0.b32.cont [14/16] 0.0, 128
    %81 = vxpose.xlu0.b32.cont [15/16] 0.0, 128
    %82 = vxpose.xlu0.b32.end [16/16] 0.0, 128
    %v83 = vpop.trf.xlu0
    %v84 = vpop.trf.xlu0
    %v85 = vpop.trf.xlu0
    %v86 = vpop.trf.xlu0
    %v87 = vpop.trf.xlu0
    %v88 = vpop.trf.xlu0
    %v89 = vpop.trf.xlu0
    %v90 = vpop.trf.xlu0
    %v91 = vpop.trf.xlu0
    %v92 = vpop.trf.xlu0
    %v93 = vpop.trf.xlu0
    %v94 = vpop.trf.xlu0
    %v95 = vpop.trf.xlu0
    %v96 = vpop.trf.xlu0
    %v97 = vpop.trf.xlu0
    %v98 = vpop.trf.xlu0
    %vm99 = vcmask 64512
    %v100 = vsel %vm99, %v83, 0.0
    %v101 = vsel %vm99, %v84, 0.0
    %v102 = vadd.f32 %v100, %v101
    %v103 = vsel %vm99, %v85, 0.0
    %v104 = vadd.f32 %v102, %v103
    %v105 = vsel %vm99, %v86, 0.0
    %v106 = vadd.f32 %v104, %v105
    %v107 = vsel %vm99, %v87, 0.0
    %v108 = vadd.f32 %v106, %v107
    %v109 = vsel %vm99, %v88, 0.0
    %v110 = vadd.f32 %v108, %v109
    %v111 = vsel %vm99, %v89, 0.0
    %v112 = vadd.f32 %v110, %v111
    %v113 = vsel %vm99, %v90, 0.0
    %v114 = vadd.f32 %v112, %v113
    %v115 = vsel %vm99, %v91, 0.0
    %v116 = vadd.f32 %v114, %v115
    %v117 = vsel %vm99, %v92, 0.0
    %v118 = vadd.f32 %v116, %v117
    %v119 = vsel %vm99, %v93, 0.0
    %v120 = vadd.f32 %v118, %v119
    %v121 = vsel %vm99, %v94, 0.0
    %v122 = vadd.f32 %v120, %v121
    %v123 = vsel %vm99, %v95, 0.0
    %v124 = vadd.f32 %v122, %v123
    %v125 = vsel %vm99, %v96, 0.0
    %v126 = vadd.f32 %v124, %v125
    %v127 = vsel %vm99, %v97, 0.0
    %v128 = vadd.f32 %v126, %v127
    %v129 = vsel %vm99, %v98, 0.0
    %v130 = vadd.f32 %v128, %v129
    %v131 = vrot.slane %v130, 4
    %v132 = vadd.f32 %v130, %v131
    %v133 = vrot.slane %v132, 2
    %v134 = vadd.f32 %v132, %v133
    %v135 = vrot.slane %v134, 1
    %v136 = vadd.f32 %v134, %v135
    %s137 = sld [smem:[#allocation2]]
    %v138 = vstv %s137
    %v139 = vadd.f32 %v136, %v138
    %v140 = vsub.f32 0.0, %v139
    %v141 = vmul.f32 %v140, 1.442695
    %v142 = vpow.pop %v141
    %v143 = vadd.f32 %v142, 1.0
    %v144 = vrcp.pop %v143
    %v145 = vmul.f32 1.0, %v144
    %vm146 = vcmask 57344
    %147 = vst.msk [vmem:[#allocation6] sm:$0x1] %vm146, %v145
    // Predicated region
    $region18: #{tpu_custom_call.1} parent=1 // pred_check
      _
    $region19: #{tpu_custom_call.1} parent=1 // pred_check_branch
      %149 = sbr.rel (0) target = $region21
    $region20: #{tpu_custom_call.1} parent=1 // pred_region
      %s151 = ssub.s32 16, 16
      %152 = vsyncadd [#allocation5], %s151
      %s154 = sshll.u32 [#allocation6], 4
      %s155 = int_to_ptr.vmem [resolvable:$true] %s154
      %157 = dma.vmem_to_hbm [thread:$0]  %s155, 16, %s3, [#allocation5]
    $region21: #{tpu_custom_call.1} parent=1 // pred_fallthru
      _
    // Predicated region
    $region22: #{tpu_custom_call.1} parent=1 // pred_check
      _
    $region23: #{tpu_custom_call.1} parent=1 // pred_check_branch
      %159 = sbr.rel (0) target = $region25
    $region24: #{tpu_custom_call.1} parent=1 // pred_region
      %160 = dma.done [#allocation5], 16
    $region25: #{tpu_custom_call.1} parent=1 // pred_fallthru
      _
    %161 = vsyncpa [#allocation4], 1
    %162 = vsyncpa [#allocation5], 1

</llo_original>
